<compile_context>
chip_gen: v6e
topology: v6e:2x2x1
jax: 0.10.0
libtpu: 0.0.40
codegen_flags: <defaults>
</compile_context>

<pallas_src>
import jax
import jax.numpy as jnp
from jax import lax
from jax.experimental import pallas as pl
from jax.experimental.pallas import tpu as pltpu


def _round_up(x, m):
    return (x + m - 1) // m * m


def _vmem_capacity_bytes():
    """Physical VMEM per TensorCore; conservative fallback if query fails."""
    try:
        info = pltpu.get_tpu_info()
        cap = getattr(info, "vmem_capacity_bytes", None)
        if cap:
            return int(cap)
    except Exception:
        pass
    return 64 << 20  # v7x-sized conservative default


def vertical_conv_kernel(w_ref, b_ref, x_ref, o_ref):
    """Compute one (TB, TE) output tile.

    w_ref: SMEM (L,)  f32 conv weights (one scalar per sequence position)
    b_ref: SMEM (1,)  f32 bias
    x_ref: VMEM (TB, L, TE) input tile
    o_ref: VMEM (TB, TE) output tile
    """
    L = x_ref.shape[1]
    # Scalar (SMEM) x vector (VPU) multiply-accumulate over the sequence
    # axis; scalars broadcast from sreg for free. Bias folded into first MAC.
    acc = x_ref[:, 0, :].astype(jnp.float32) * w_ref[0] + b_ref[0]
    if L <= 32:
        # Full unroll for short sequences (LLO scheduler visibility).
        for t in range(1, L):
            acc = acc + x_ref[:, t, :].astype(jnp.float32) * w_ref[t]
    else:
        # Partially-unrolled loop for long sequences: bounds code size and
        # vreg live ranges while keeping scheduler visibility.
        def body(t, a):
            return a + x_ref[:, t, :].astype(jnp.float32) * w_ref[t]

        acc = lax.fori_loop(1, L, body, acc, unroll=8)
    o_ref[...] = acc.astype(o_ref.dtype)


def vertical_conv_layer(x_nchw, conv_weight, conv_bias):
    """x_nchw: (B, 1, L, E); conv_weight: (1, 1, L, 1); conv_bias: (1,).

    Returns (B, E), matching the PyTorch module's forward.
    """
    B, C, L, E = x_nchw.shape
    assert C == 1
    x3 = x_nchw.reshape(B, L, E)
    w = conv_weight.reshape(L).astype(jnp.float32)   # (L,)  -> SMEM
    b = conv_bias.reshape(1).astype(jnp.float32)     # (1,)  -> SMEM

    itemsize = jnp.dtype(x_nchw.dtype).itemsize
    # Sublane packing for the input dtype: 8 for f32, 16 for bf16, 32 for 8-bit.
    sub = max(8, 32 // itemsize)

    # --- Generation-aware per-input-buffer tile budget -----------------------
    vmem_cap = _vmem_capacity_bytes()
    # ~16 MiB on 128-MiB-VMEM chips (v5e/v6e), ~10.6 MiB on v7x (64 MiB).
    tile_budget = min(16 << 20, vmem_cap // 6)

    # Padded (physical) extents of the last two dims of the input tile.
    L_pad = _round_up(L, sub)
    E_pad = _round_up(E, 128)

    # --- Embedding tile: prefer full E (contiguous DMA, fewer grid steps) ----
    if 8 * L_pad * E_pad * itemsize <= tile_budget:
        TE = E
    else:
        # Tile E in multiples of 128 such that >= 8 batch rows fit the budget.
        te_lanes = max(1, tile_budget // (8 * L_pad * 128 * itemsize))
        TE = min(E, 128 * te_lanes)  # < E here, and a multiple of 128
    TE_pad = _round_up(TE, 128)

    # --- Batch tile: fill the budget using padded-footprint bytes ------------
    row_bytes = L_pad * TE_pad * itemsize          # padded bytes per batch row
    tb_cap = max(8, (tile_budget // row_bytes) // 8 * 8)
    TB = B if B <= tb_cap else tb_cap

    # --- Ensure >= 2 grid steps on non-trivial problems (v7x has 2 TCs) ------
    n_e_blocks = pl.cdiv(E, TE)
    if TB == B and n_e_blocks == 1:
        total_bytes = B * row_bytes
        if total_bytes >= (4 << 20):
            target = 4
        elif total_bytes >= (1 << 20):
            target = 2
        else:
            target = 1
        if target > 1 and B >= 8 * target:
            TB = _round_up(pl.cdiv(B, target), 8)

    grid = (pl.cdiv(B, TB), pl.cdiv(E, TE))

    # --- Scoped VMEM limit sized to the chosen (double-buffered) tiles -------
    in_tile_bytes = TB * L_pad * TE_pad * itemsize
    out_tile_bytes = _round_up(TB, sub) * TE_pad * itemsize
    needed = 2 * (in_tile_bytes + out_tile_bytes)      # double buffering
    vmem_limit = max(needed + needed // 2 + (2 << 20), 32 << 20)
    vmem_limit = min(vmem_limit, (3 * vmem_cap) // 4)
    vmem_limit = max(vmem_limit, needed + (1 << 20))

    cost = pl.CostEstimate(
        flops=2 * B * L * E,
        transcendentals=0,
        bytes_accessed=itemsize * (B * L * E + B * E) + 4 * (L + 1),
    )

    return pl.pallas_call(
        vertical_conv_kernel,
        out_shape=jax.ShapeDtypeStruct((B, E), x_nchw.dtype),
        grid=grid,
        in_specs=[
            pl.BlockSpec(memory_space=pltpu.MemorySpace.SMEM),   # weights (L,)
            pl.BlockSpec(memory_space=pltpu.MemorySpace.SMEM),   # bias (1,)
            pl.BlockSpec((TB, L, TE), lambda i, j: (i, 0, j)),   # x tile
        ],
        out_specs=pl.BlockSpec((TB, TE), lambda i, j: (i, j)),
        compiler_params=pltpu.CompilerParams(
            dimension_semantics=("parallel", "parallel"),
            vmem_limit_bytes=int(vmem_limit),
        ),
        cost_estimate=cost,
    )(w, b, x3)


if __name__ == "__main__":
    # Small shapes consistent with the module's forward.
    batch_size = 2
    seq_length = 8
    embedding_size = 32

    key = jax.random.PRNGKey(0)
    k_x, k_w, k_b = jax.random.split(key, 3)

    # Conv2d(1, 1, (L, 1)) parameter shapes; PyTorch default init is
    # U(-bound, bound) with bound = 1/sqrt(fan_in), fan_in = 1 * L * 1.
    bound = 1.0 / jnp.sqrt(jnp.float32(seq_length))
    conv_weight = jax.random.uniform(
        k_w, (1, 1, seq_length, 1), jnp.float32, minval=-bound, maxval=bound)
    conv_bias = jax.random.uniform(
        k_b, (1,), jnp.float32, minval=-bound, maxval=bound)

    # Input in NCHW: (B, 1, L, E)
    x = jax.random.normal(
        k_x, (batch_size, 1, seq_length, embedding_size), jnp.float32)

    out = vertical_conv_layer(x, conv_weight, conv_bias)
    out = jax.block_until_ready(out)

    # Pure-JAX reference of the same conv (weighted sum over seq + bias).
    ref = (x[:, 0] * conv_weight.reshape(1, seq_length, 1)).sum(axis=1) \
        + conv_bias.reshape(1, 1)

    assert out.shape == (batch_size, embedding_size)
    assert jnp.allclose(out, ref, atol=1e-5, rtol=1e-5)
    print("KERNEL_OK")
</pallas_src>

<mosaic_0001>
module attributes {stable_mosaic.version = 11 : i64} {
  func.func @vertical_conv_kernel(%arg0: i32, %arg1: i32, %arg2: memref<8xf32, #tpu.memory_space<smem>>, %arg3: memref<1xf32, #tpu.memory_space<smem>>, %arg4: memref<2x8x32xf32, #tpu.memory_space<vmem>>, %arg5: memref<2x32xf32, #tpu.memory_space<vmem>>) attributes {dimension_semantics = [#tpu.dimension_semantics<parallel>, #tpu.dimension_semantics<parallel>], iteration_bounds = array<i64: 1, 1>, scalar_prefetch = 0 : i64, scratch_operands = 0 : i64, tpu.core_type = #tpu.core_type<tc>, window_params = [{transform_indices = @transform_0, window_bounds = array<i64: 8>}, {transform_indices = @transform_1, window_bounds = array<i64: 1>}, {transform_indices = @transform_2, window_bounds = array<i64: 2, 8, 32>}, {transform_indices = @transform_3, window_bounds = array<i64: 2, 32>}]} {
    %c0 = arith.constant 0 : index
    %c0_0 = arith.constant 0 : index
    %c0_1 = arith.constant 0 : index
    %0 = vector.load %arg4[%c0, %c0_0, %c0_1] : memref<2x8x32xf32, #tpu.memory_space<vmem>>, vector<2x1x32xf32>
    %1 = vector.shape_cast %0 : vector<2x1x32xf32> to vector<2x32xf32>
    %c0_2 = arith.constant 0 : index
    %2 = memref.load %arg2[%c0_2] : memref<8xf32, #tpu.memory_space<smem>>
    %3 = vector.broadcast %2 : f32 to vector<2x32xf32>
    %4 = arith.mulf %1, %3 : vector<2x32xf32>
    %c0_3 = arith.constant 0 : index
    %5 = memref.load %arg3[%c0_3] : memref<1xf32, #tpu.memory_space<smem>>
    %6 = vector.broadcast %5 : f32 to vector<2x32xf32>
    %7 = arith.addf %4, %6 : vector<2x32xf32>
    %c0_4 = arith.constant 0 : index
    %c1 = arith.constant 1 : index
    %c0_5 = arith.constant 0 : index
    %8 = vector.load %arg4[%c0_4, %c1, %c0_5] : memref<2x8x32xf32, #tpu.memory_space<vmem>>, vector<2x1x32xf32>
    %9 = vector.shape_cast %8 : vector<2x1x32xf32> to vector<2x32xf32>
    %c1_6 = arith.constant 1 : index
    %10 = memref.load %arg2[%c1_6] : memref<8xf32, #tpu.memory_space<smem>>
    %11 = vector.broadcast %10 : f32 to vector<2x32xf32>
    %12 = arith.mulf %9, %11 : vector<2x32xf32>
    %13 = arith.addf %7, %12 : vector<2x32xf32>
    %c0_7 = arith.constant 0 : index
    %c2 = arith.constant 2 : index
    %c0_8 = arith.constant 0 : index
    %14 = vector.load %arg4[%c0_7, %c2, %c0_8] : memref<2x8x32xf32, #tpu.memory_space<vmem>>, vector<2x1x32xf32>
    %15 = vector.shape_cast %14 : vector<2x1x32xf32> to vector<2x32xf32>
    %c2_9 = arith.constant 2 : index
    %16 = memref.load %arg2[%c2_9] : memref<8xf32, #tpu.memory_space<smem>>
    %17 = vector.broadcast %16 : f32 to vector<2x32xf32>
    %18 = arith.mulf %15, %17 : vector<2x32xf32>
    %19 = arith.addf %13, %18 : vector<2x32xf32>
    %c0_10 = arith.constant 0 : index
    %c3 = arith.constant 3 : index
    %c0_11 = arith.constant 0 : index
    %20 = vector.load %arg4[%c0_10, %c3, %c0_11] : memref<2x8x32xf32, #tpu.memory_space<vmem>>, vector<2x1x32xf32>
    %21 = vector.shape_cast %20 : vector<2x1x32xf32> to vector<2x32xf32>
    %c3_12 = arith.constant 3 : index
    %22 = memref.load %arg2[%c3_12] : memref<8xf32, #tpu.memory_space<smem>>
    %23 = vector.broadcast %22 : f32 to vector<2x32xf32>
    %24 = arith.mulf %21, %23 : vector<2x32xf32>
    %25 = arith.addf %19, %24 : vector<2x32xf32>
    %c0_13 = arith.constant 0 : index
    %c4 = arith.constant 4 : index
    %c0_14 = arith.constant 0 : index
    %26 = vector.load %arg4[%c0_13, %c4, %c0_14] : memref<2x8x32xf32, #tpu.memory_space<vmem>>, vector<2x1x32xf32>
    %27 = vector.shape_cast %26 : vector<2x1x32xf32> to vector<2x32xf32>
    %c4_15 = arith.constant 4 : index
    %28 = memref.load %arg2[%c4_15] : memref<8xf32, #tpu.memory_space<smem>>
    %29 = vector.broadcast %28 : f32 to vector<2x32xf32>
    %30 = arith.mulf %27, %29 : vector<2x32xf32>
    %31 = arith.addf %25, %30 : vector<2x32xf32>
    %c0_16 = arith.constant 0 : index
    %c5 = arith.constant 5 : index
    %c0_17 = arith.constant 0 : index
    %32 = vector.load %arg4[%c0_16, %c5, %c0_17] : memref<2x8x32xf32, #tpu.memory_space<vmem>>, vector<2x1x32xf32>
    %33 = vector.shape_cast %32 : vector<2x1x32xf32> to vector<2x32xf32>
    %c5_18 = arith.constant 5 : index
    %34 = memref.load %arg2[%c5_18] : memref<8xf32, #tpu.memory_space<smem>>
    %35 = vector.broadcast %34 : f32 to vector<2x32xf32>
    %36 = arith.mulf %33, %35 : vector<2x32xf32>
    %37 = arith.addf %31, %36 : vector<2x32xf32>
    %c0_19 = arith.constant 0 : index
    %c6 = arith.constant 6 : index
    %c0_20 = arith.constant 0 : index
    %38 = vector.load %arg4[%c0_19, %c6, %c0_20] : memref<2x8x32xf32, #tpu.memory_space<vmem>>, vector<2x1x32xf32>
    %39 = vector.shape_cast %38 : vector<2x1x32xf32> to vector<2x32xf32>
    %c6_21 = arith.constant 6 : index
    %40 = memref.load %arg2[%c6_21] : memref<8xf32, #tpu.memory_space<smem>>
    %41 = vector.broadcast %40 : f32 to vector<2x32xf32>
    %42 = arith.mulf %39, %41 : vector<2x32xf32>
    %43 = arith.addf %37, %42 : vector<2x32xf32>
    %c0_22 = arith.constant 0 : index
    %c7 = arith.constant 7 : index
    %c0_23 = arith.constant 0 : index
    %44 = vector.load %arg4[%c0_22, %c7, %c0_23] : memref<2x8x32xf32, #tpu.memory_space<vmem>>, vector<2x1x32xf32>
    %45 = vector.shape_cast %44 : vector<2x1x32xf32> to vector<2x32xf32>
    %c7_24 = arith.constant 7 : index
    %46 = memref.load %arg2[%c7_24] : memref<8xf32, #tpu.memory_space<smem>>
    %47 = vector.broadcast %46 : f32 to vector<2x32xf32>
    %48 = arith.mulf %45, %47 : vector<2x32xf32>
    %49 = arith.addf %43, %48 : vector<2x32xf32>
    %c0_25 = arith.constant 0 : index
    %c0_26 = arith.constant 0 : index
    %50 = vector.load %arg5[%c0_25, %c0_26] : memref<2x32xf32, #tpu.memory_space<vmem>>, vector<2x32xf32>
    tpu.vector_store %arg5[%c0_25, %c0_26], %49 {strides = array<i32>} : memref<2x32xf32, #tpu.memory_space<vmem>>, vector<2x32xf32>,
    return
  }
  func.func @transform_0(%arg0: i32, %arg1: i32) -> i32 {
    %c0_i32 = arith.constant 0 : i32
    %c0_i32_0 = arith.constant 0 : i32
    return %c0_i32 : i32
  }
  func.func @transform_1(%arg0: i32, %arg1: i32) -> i32 {
    %c0_i32 = arith.constant 0 : i32
    %c0_i32_0 = arith.constant 0 : i32
    return %c0_i32 : i32
  }
  func.func @transform_2(%arg0: i32, %arg1: i32) -> (i32, i32, i32) {
    %c0_i32 = arith.constant 0 : i32
    %c0_i32_0 = arith.constant 0 : i32
    return %arg0, %c0_i32, %arg1 : i32, i32, i32
  }
  func.func @transform_3(%arg0: i32, %arg1: i32) -> (i32, i32) {
    %c0_i32 = arith.constant 0 : i32
    return %arg0, %arg1 : i32, i32
  }
}

</mosaic_0001>

<llo_original>
// kernel: tpu_custom_call.1
$region0: #{tpu_custom_call.1}
  #allocation0 [shape = 'u32[]', space=smem, size = 0x4, offset = 0x4, fixed_abs, tag = 'smem constant byte address 0x4 - core index']
  #allocation1 [shape = 'u32[144,128]{1,0:T(1,128)}', space=vmem, size = 0x12000, scoped, tag = 'internal scratch']
  #allocation2 [shape = 'f32[1]{0:T(128)S(6)}', space=smem, size = 0x200, scoped, tag = 'scoped memory for tpu_custom_call.1']
  %s0 = inlined_call_operand.vmem [shape: f32[8], index: 0, kind: input, shape index: {}]
  %s1 = inlined_call_operand.<no memory space> [shape: f32[1], index: 1, kind: input, shape index: {}]
  %s2 = inlined_call_operand.hbm [shape: f32[2,8,32], index: 2, kind: input, shape index: {}]
  %s3 = inlined_call_operand.hbm [shape: f32[2,32], index: 3, kind: output, shape index: {}]
  %s4 = sld [smem:[#allocation0]]
  $region30: #{tpu_custom_call.1} parent=0
    _
  %s6 = ssub.s32 1, %s4
  %s7 = scalar_select 0, %s6, %s4
  %8 = sst [smem:[#allocation2]] %s1
  $region1: #{tpu_custom_call.1} parent=0
    #allocation3 [shape = 'u8[512]{0}', space=smem, size = 0x200, scoped, tag = 'input window, operand 0, single buffered']
    #allocation4 [shape = 's32[1]{0}', space=sflag, size = 0x4, scoped, tag = 'scoped memory for tpu_custom_call.1']
    #allocation5 [shape = 's32[1]{0}', space=sflag, size = 0x4, scoped, tag = 'scoped memory for tpu_custom_call.1']
    #allocation6 [shape = 's32[1]{0}', space=sflag, size = 0x4, scoped, tag = 'scoped memory for tpu_custom_call.1']
    #allocation7 [shape = 'u8[8192]{0}', space=vmem, size = 0x2000, scoped, tag = 'input window, operand 2, single buffered']
    #allocation8 [shape = 'u8[1024]{0}', space=vmem, size = 0x400, scoped, tag = 'output window, operand 0, single buffered']
    %9 = vsyncpa [#allocation6], 0
    %10 = vsyncpa [#allocation4], 0
    %11 = vsyncpa [#allocation5], 0
    // Predicated region
    $region2: #{tpu_custom_call.1} parent=1 // pred_check
      _
    $region3: #{tpu_custom_call.1} parent=1 // pred_check_branch
      %13 = sbr.rel (0) target = $region5
    $region4: #{tpu_custom_call.1} parent=1 // pred_region
      %s15 = ssub.s32 16, 16
      %16 = vsyncadd [#allocation6], %s15
      %s18 = sshll.u32 %s0, 4
      %s19 = int_to_ptr.vmem [resolvable:$true] %s18
      %21 = dma.vmem_to_smem %s19, 16, [#allocation3], [#allocation6]
    $region5: #{tpu_custom_call.1} parent=1 // pred_fallthru
      _
    // Predicated region
    $region6: #{tpu_custom_call.1} parent=1 // pred_check
      _
    $region7: #{tpu_custom_call.1} parent=1 // pred_check_branch
      %23 = sbr.rel (0) target = $region9
    $region8: #{tpu_custom_call.1} parent=1 // pred_region
      _
    $region9: #{tpu_custom_call.1} parent=1 // pred_fallthru
      _
    // Predicated region
    $region10: #{tpu_custom_call.1} parent=1 // pred_check
      _
    $region11: #{tpu_custom_call.1} parent=1 // pred_check_branch
      %25 = sbr.rel (0) target = $region13
    $region12: #{tpu_custom_call.1} parent=1 // pred_region
      %s27 = ssub.s32 256, 256
      %28 = vsyncadd [#allocation4], %s27
      %s29 = sshll.u32 [#allocation7], 4
      %s30 = int_to_ptr.vmem [resolvable:$true] %s29
      %35 = dma.hbm_to_vmem [thread:$0]  %s2, 256, %s30, [#allocation4], 128, 128, 8
    $region13: #{tpu_custom_call.1} parent=1 // pred_fallthru
      _
    // Predicated region
    $region14: #{tpu_custom_call.1} parent=1 // pred_check
      _
    $region15: #{tpu_custom_call.1} parent=1 // pred_check_branch
      %37 = sbr.rel (0) target = $region17
    $region16: #{tpu_custom_call.1} parent=1 // pred_region
      %38 = dma.done [#allocation6], 16
    $region17: #{tpu_custom_call.1} parent=1 // pred_fallthru
      _
    // Predicated region
    $region18: #{tpu_custom_call.1} parent=1 // pred_check
      _
    $region19: #{tpu_custom_call.1} parent=1 // pred_check_branch
      %40 = sbr.rel (0) target = $region21
    $region20: #{tpu_custom_call.1} parent=1 // pred_region
      %41 = dma.done [#allocation4], 256
    $region21: #{tpu_custom_call.1} parent=1 // pred_fallthru
      _
    %42 = sfence
    %v43 = vld [vmem:[#allocation7] sm:$0x1]
    %v44 = vld [vmem:[#allocation7 + $0x8] sm:$0x1]
    %s45 = sld [smem:[#allocation3]]
    %v46 = vstv %s45
    %v47 = vmul.f32 %v43, %v46
    %v48 = vmul.f32 %v44, %v46
    %s49 = sld [smem:[#allocation2]]
    %v50 = vstv %s49
    %v51 = vadd.f32 %v47, %v50
    %v52 = vadd.f32 %v48, %v50
    %v53 = vld [vmem:[#allocation7 + $0x1] sm:$0x1]
    %v54 = vld [vmem:[#allocation7 + $0x9] sm:$0x1]
    %s55 = sld [smem:[#allocation3 + $0x1]]
    %v56 = vstv %s55
    %v57 = vmul.f32 %v53, %v56
    %v58 = vmul.f32 %v54, %v56
    %v59 = vadd.f32 %v51, %v57
    %v60 = vadd.f32 %v52, %v58
    %v61 = vld [vmem:[#allocation7 + $0x2] sm:$0x1]
    %v62 = vld [vmem:[#allocation7 + $0xa] sm:$0x1]
    %s63 = sld [smem:[#allocation3 + $0x2]]
    %v64 = vstv %s63
    %v65 = vmul.f32 %v61, %v64
    %v66 = vmul.f32 %v62, %v64
    %v67 = vadd.f32 %v59, %v65
    %v68 = vadd.f32 %v60, %v66
    %v69 = vld [vmem:[#allocation7 + $0x3] sm:$0x1]
    %v70 = vld [vmem:[#allocation7 + $0xb] sm:$0x1]
    %s71 = sld [smem:[#allocation3 + $0x3]]
    %v72 = vstv %s71
    %v73 = vmul.f32 %v69, %v72
    %v74 = vmul.f32 %v70, %v72
    %v75 = vadd.f32 %v67, %v73
    %v76 = vadd.f32 %v68, %v74
    %v77 = vld [vmem:[#allocation7 + $0x4] sm:$0x1]
    %v78 = vld [vmem:[#allocation7 + $0xc] sm:$0x1]
    %s79 = sld [smem:[#allocation3 + $0x4]]
    %v80 = vstv %s79
    %v81 = vmul.f32 %v77, %v80
    %v82 = vmul.f32 %v78, %v80
    %v83 = vadd.f32 %v75, %v81
    %v84 = vadd.f32 %v76, %v82
    %v85 = vld [vmem:[#allocation7 + $0x5] sm:$0x1]
    %v86 = vld [vmem:[#allocation7 + $0xd] sm:$0x1]
    %s87 = sld [smem:[#allocation3 + $0x5]]
    %v88 = vstv %s87
    %v89 = vmul.f32 %v85, %v88
    %v90 = vmul.f32 %v86, %v88
    %v91 = vadd.f32 %v83, %v89
    %v92 = vadd.f32 %v84, %v90
    %v93 = vld [vmem:[#allocation7 + $0x6] sm:$0x1]
    %v94 = vld [vmem:[#allocation7 + $0xe] sm:$0x1]
    %s95 = sld [smem:[#allocation3 + $0x6]]
    %v96 = vstv %s95
    %v97 = vmul.f32 %v93, %v96
    %v98 = vmul.f32 %v94, %v96
    %v99 = vadd.f32 %v91, %v97
    %v100 = vadd.f32 %v92, %v98
    %v101 = vld [vmem:[#allocation7 + $0x7] sm:$0x1]
    %v102 = vld [vmem:[#allocation7 + $0xf] sm:$0x1]
    %s103 = sld [smem:[#allocation3 + $0x7]]
    %v104 = vstv %s103
    %v105 = vmul.f32 %v101, %v104
    %v106 = vmul.f32 %v102, %v104
    %v107 = vadd.f32 %v99, %v105
    %v108 = vadd.f32 %v100, %v106
    %v111 = vrot.slane %v108, 7
    %vm112 = vcmask 1041409
    %v113 = vsel %vm112, %v111, %v107
    %vm115 = vcmask 254976
    %116 = vst.msk [vmem:[#allocation8] sm:$0x3] %vm115, %v113
    // Predicated region
    $region22: #{tpu_custom_call.1} parent=1 // pred_check
      _
    $region23: #{tpu_custom_call.1} parent=1 // pred_check_branch
      %118 = sbr.rel (0) target = $region25
    $region24: #{tpu_custom_call.1} parent=1 // pred_region
      %s120 = ssub.s32 32, 32
      %121 = vsyncadd [#allocation5], %s120
      %s123 = sshll.u32 [#allocation8], 4
      %s124 = int_to_ptr.vmem [resolvable:$true] %s123
      %126 = dma.vmem_to_hbm [thread:$0]  %s124, 32, %s3, [#allocation5]
    $region25: #{tpu_custom_call.1} parent=1 // pred_fallthru
      _
    // Predicated region
    $region26: #{tpu_custom_call.1} parent=1 // pred_check
      _
    $region27: #{tpu_custom_call.1} parent=1 // pred_check_branch
      %128 = sbr.rel (0) target = $region29
    $region28: #{tpu_custom_call.1} parent=1 // pred_region
      %129 = dma.done [#allocation5], 32
    $region29: #{tpu_custom_call.1} parent=1 // pred_fallthru
      _
    %130 = vsyncpa [#allocation4], 1
    %131 = vsyncpa [#allocation5], 1
    %132 = vsyncpa [#allocation6], 1

</llo_original>
